<compile_context>
chip_gen: v6e
topology: v6e:2x2x1
jax: 0.10.0
libtpu: 0.0.40
codegen_flags: <defaults>
</compile_context>

<pallas_src>
import jax
import jax.numpy as jnp
from jax.experimental import pallas as pl
from jax.experimental.pallas import tpu as pltpu


def _round_up(x, m):
    return ((x + m - 1) // m) * m


def _bbox_head_kernel(x_ref, w_ref, b_ref, o_ref):
    # x_ref: (bn, C, T)   w_ref: (C_out, C)   b_ref: (1, C_out)   o_ref: (bn, T, C_out)
    # Spatial dim T sits on the lanes of the input -> big, lane-dense input DMA.
    w = w_ref[...]
    b = b_ref[...]
    for i in range(x_ref.shape[0]):  # bn is small & static -> unrolled
        # (C_out, T) = (12, C) @ (C, T) on the MXU, f32 accumulation.
        acc = jnp.dot(w, x_ref[i], preferred_element_type=jnp.float32)
        # Tiny (12, T) -> (T, 12) transpose on the XLU; hidden under the input DMA.
        o_ref[i] = (acc.T + b).astype(o_ref.dtype)


def bbox_head_forward(x_nchw, weight, bias, *, num_anchors=3,
                      target_block_bytes=4 << 20, vmem_limit_bytes=48 << 20):
    """x_nchw: (N, C, H, W); weight: (C_out, C) or (C_out, C, 1, 1); bias: (C_out,)."""
    N, C, H, W = x_nchw.shape
    if weight.ndim == 4:  # accept raw 1x1-conv weights
        weight = weight.reshape(weight.shape[0], weight.shape[1])
    C_out = weight.shape[0]
    assert C_out == num_anchors * 4

    HW = H * W
    dtype_bytes = jnp.dtype(x_nchw.dtype).itemsize
    HW_r = _round_up(HW, 128)

    # ---- spatial tile: as large as the per-step byte budget allows (multiple of 128) ----
    hw_tile = max(128, (target_block_bytes // max(1, C * dtype_bytes)) // 128 * 128)
    hw_tile = max(128, min(hw_tile, HW_r, 8192))
    # v7x megacore: if a single sample covers the whole map in one tile, split it in two so
    # the second TensorCore has work. No effect on v5e/v6e beyond a slightly smaller tile.
    if N == 1 and HW_r > 128 and hw_tile >= HW_r:
        hw_tile = max(128, _round_up(pl.cdiv(HW, 2), 128))
    n_tiles = pl.cdiv(HW, hw_tile)

    # ---- batch block: small pyramid levels (whole map in one tile) move several samples per
    # grid step so each step DMAs >= ~1 MiB instead of a few hundred KiB ----
    bn = 1
    if n_tiles == 1 and N > 1:
        slab = C * hw_tile * dtype_bytes
        bn = max(1, min(N, target_block_bytes // max(1, slab)))
        bn = min(bn, 8)                    # keep the in-kernel unroll small
        bn = min(bn, max(1, N // 2))       # keep >= 2 grid steps for megacore
    n_batch = pl.cdiv(N, bn)

    x_flat = x_nchw.reshape(N, C, HW)      # pure view of NCHW: no activation data movement
    b2d = bias.reshape(1, C_out)           # broadcasts over the spatial (sublane) dim

    cost = pl.CostEstimate(
        flops=2 * N * C_out * C * HW,
        transcendentals=0,
        bytes_accessed=(N * C * HW + N * HW * C_out) * dtype_bytes
        + (C_out * C + C_out) * jnp.dtype(weight.dtype).itemsize,
    )

    out_nhwc = pl.pallas_call(
        _bbox_head_kernel,
        out_shape=jax.ShapeDtypeStruct((N, HW, C_out), x_nchw.dtype),
        grid_spec=pltpu.PrefetchScalarGridSpec(
            num_scalar_prefetch=0,
            grid=(n_batch, n_tiles),
            in_specs=[
                # Activation block: (bn, C, hw_tile) slab, spatial dim on the lanes.
                pl.BlockSpec((bn, C, hw_tile), lambda n, j: (n, 0, j)),
                # Weight / bias: resident, constant index map (not re-fetched per step).
                pl.BlockSpec((C_out, C), lambda n, j: (0, 0)),
                pl.BlockSpec((1, C_out), lambda n, j: (0, 0)),
            ],
            # Output already in NHWC-flat order -> no post-kernel transpose pass over HBM.
            out_specs=pl.BlockSpec((bn, hw_tile, C_out), lambda n, j: (n, j, 0)),
        ),
        compiler_params=pltpu.CompilerParams(
            dimension_semantics=("parallel", "parallel"),
            vmem_limit_bytes=vmem_limit_bytes,
        ),
        cost_estimate=cost,
    )(x_flat, weight, b2d)

    # torch: conv1x1 -> permute(0,2,3,1) -> view(N, -1, 4). The last dim is already
    # C_out = A*4 in channel order, so this reshape is a free view and matches exactly.
    return out_nhwc.reshape(N, HW * num_anchors, 4)


if __name__ == "__main__":
    def _reference(x, w, b, num_anchors):
        n, c, h, wd = x.shape
        ref = jnp.einsum("nchw,oc->nhwo", x, w) + b
        return ref.reshape(n, h * wd * num_anchors, 4)

    num_anchors = 3
    C_out = num_anchors * 4
    key = jax.random.PRNGKey(0)

    # Small configs exercising: main path, batch-blocked small map, N==1 split + partial tile.
    configs = [(2, 32, 16, 16), (4, 32, 8, 8), (1, 32, 20, 20)]

    for (N, C, H, W) in configs:
        key, kx, kw, kb = jax.random.split(key, 4)
        x = jax.random.normal(kx, (N, C, H, W), dtype=jnp.float32)
        weight = jax.random.normal(kw, (C_out, C), dtype=jnp.float32) * 0.05
        bias = jax.random.normal(kb, (C_out,), dtype=jnp.float32) * 0.05

        out = bbox_head_forward(x, weight, bias, num_anchors=num_anchors)
        out = jax.block_until_ready(out)

        ref = _reference(x, weight, bias, num_anchors)
        assert out.shape == (N, H * W * num_anchors, 4), out.shape
        assert jnp.allclose(out, ref, atol=1e-4, rtol=1e-4), (N, C, H, W)

    print("KERNEL_OK")
</pallas_src>

<mosaic_0001>
module attributes {stable_mosaic.version = 11 : i64} {
  func.func @_bbox_head_kernel(%arg0: i32, %arg1: i32, %arg2: memref<1x32x256xf32, #tpu.memory_space<vmem>>, %arg3: memref<12x32xf32, #tpu.memory_space<vmem>>, %arg4: memref<1x12xf32, #tpu.memory_space<vmem>>, %arg5: memref<1x256x12xf32, #tpu.memory_space<vmem>>) attributes {dimension_semantics = [#tpu.dimension_semantics<parallel>, #tpu.dimension_semantics<parallel>], iteration_bounds = array<i64: 2, 1>, scalar_prefetch = 0 : i64, scratch_operands = 0 : i64, tpu.core_type = #tpu.core_type<tc>, window_params = [{transform_indices = @transform_0, window_bounds = array<i64: 1, 32, 256>}, {pipeline_mode = #tpu.pipeline_mode<synchronous>, transform_indices = @transform_1, window_bounds = array<i64: 12, 32>}, {pipeline_mode = #tpu.pipeline_mode<synchronous>, transform_indices = @transform_2, window_bounds = array<i64: 1, 12>}, {transform_indices = @transform_3, window_bounds = array<i64: 1, 256, 12>}]} {
    %c0 = arith.constant 0 : index
    %c0_0 = arith.constant 0 : index
    %0 = vector.load %arg3[%c0, %c0_0] : memref<12x32xf32, #tpu.memory_space<vmem>>, vector<12x32xf32>
    %c0_1 = arith.constant 0 : index
    %c0_2 = arith.constant 0 : index
    %1 = vector.load %arg4[%c0_1, %c0_2] : memref<1x12xf32, #tpu.memory_space<vmem>>, vector<1x12xf32>
    %c0_3 = arith.constant 0 : index
    %c0_4 = arith.constant 0 : index
    %c0_5 = arith.constant 0 : index
    %2 = vector.load %arg2[%c0_3, %c0_4, %c0_5] : memref<1x32x256xf32, #tpu.memory_space<vmem>>, vector<1x32x256xf32>
    %3 = vector.shape_cast %2 : vector<1x32x256xf32> to vector<32x256xf32>
    %cst = arith.constant dense<0.000000e+00> : vector<12x256xf32>
    %4 = tpu.matmul %0, %3, %cst {dimension_numbers = #tpu.dot_dimension_numbers<[1], [0], [0], [1], [0, 0, 1, 1], [], []>} : vector<12x32xf32>, vector<32x256xf32>, vector<12x256xf32> -> vector<12x256xf32>
    %5 = tpu.transpose %4, [1, 0] : vector<12x256xf32> -> vector<256x12xf32>
    %6 = vector.broadcast %1 : vector<1x12xf32> to vector<256x12xf32>
    %7 = arith.addf %5, %6 : vector<256x12xf32>
    %c0_6 = arith.constant 0 : index
    %c0_7 = arith.constant 0 : index
    %c0_8 = arith.constant 0 : index
    %8 = vector.load %arg5[%c0_6, %c0_7, %c0_8] : memref<1x256x12xf32, #tpu.memory_space<vmem>>, vector<1x256x12xf32>
    %9 = vector.shape_cast %8 : vector<1x256x12xf32> to vector<256x12xf32>
    %10 = vector.shape_cast %7 : vector<256x12xf32> to vector<1x256x12xf32>
    tpu.vector_store %arg5[%c0_6, %c0_7, %c0_8], %10 {strides = array<i32>} : memref<1x256x12xf32, #tpu.memory_space<vmem>>, vector<1x256x12xf32>,
    return
  }
  func.func @transform_0(%arg0: i32, %arg1: i32) -> (i32, i32, i32) {
    %c0_i32 = arith.constant 0 : i32
    %c0_i32_0 = arith.constant 0 : i32
    return %arg0, %c0_i32, %arg1 : i32, i32, i32
  }
  func.func @transform_1(%arg0: i32, %arg1: i32) -> (i32, i32) {
    %c0_i32 = arith.constant 0 : i32
    %c0_i32_0 = arith.constant 0 : i32
    %c0_i32_1 = arith.constant 0 : i32
    return %c0_i32, %c0_i32_0 : i32, i32
  }
  func.func @transform_2(%arg0: i32, %arg1: i32) -> (i32, i32) {
    %c0_i32 = arith.constant 0 : i32
    %c0_i32_0 = arith.constant 0 : i32
    %c0_i32_1 = arith.constant 0 : i32
    return %c0_i32, %c0_i32_0 : i32, i32
  }
  func.func @transform_3(%arg0: i32, %arg1: i32) -> (i32, i32, i32) {
    %c0_i32 = arith.constant 0 : i32
    %c0_i32_0 = arith.constant 0 : i32
    return %arg0, %arg1, %c0_i32 : i32, i32, i32
  }
}

</mosaic_0001>

<llo_original>
// kernel: tpu_custom_call.1
$region0: #{tpu_custom_call.1}
  #allocation0 [shape = 'u32[]', space=smem, size = 0x4, offset = 0x4, fixed_abs, tag = 'smem constant byte address 0x4 - core index']
  #allocation1 [shape = 'u32[144,128]{1,0:T(1,128)}', space=vmem, size = 0x12000, scoped, tag = 'internal scratch']
  %s0 = inlined_call_operand.hbm [shape: f32[2,32,256], index: 0, kind: input, shape index: {}]
  %s1 = inlined_call_operand.hbm [shape: f32[12,32], index: 1, kind: input, shape index: {}]
  %s2 = inlined_call_operand.vmem [shape: f32[1,12], index: 2, kind: input, shape index: {}]
  %s3 = inlined_call_operand.vmem [shape: f32[2,256,12], index: 3, kind: output, shape index: {}]
  %s4 = sld [smem:[#allocation0]]
  $region53: #{tpu_custom_call.1} parent=0
    _
  %s6 = ssub.s32 1, %s4
  %s7 = scalar_select 0, %s6, %s4
  $region1: #{tpu_custom_call.1} parent=0
    #allocation2 [shape = 'u8[65536]{0}', space=vmem, size = 0x10000, scoped, tag = 'input window, operand 0']
    #allocation3 [shape = 's32[2]{0}', space=sflag, size = 0x8, scoped, tag = 'scoped memory for tpu_custom_call.1']
    #allocation4 [shape = 'u8[8192]{0}', space=vmem, size = 0x2000, scoped, tag = 'input window, operand 1, single buffered']
    #allocation5 [shape = 's32[1]{0}', space=sflag, size = 0x4, scoped, tag = 'scoped memory for tpu_custom_call.1']
    %8 = vsyncpa [#allocation3], 0
    %s9 = scalar_lea.sflag [#allocation3], 1
    %10 = vsyncpa %s9, 0
    %11 = vsyncpa [#allocation5], 0
    loop: start=0, step=1, limit=4
    $region2: #{tpu_custom_call.1} parent=1 // loop_pre_header
      _
    $region3: #{tpu_custom_call.1} parent=1 // loop_header
      %s13 = sphi 0, %s17
      %p14 = scmp.ge.s32.totalorder %s13, 4
      %s20 = sphi 0, %s32
      %s21 = sphi 0, %s28
      %s22 = sphi 0, %s20
      %s23 = sphi 0, %s21
      %s24 = sphi 0, %s22
      %s25 = sphi 0, %s23
      %s37 = sphi 0, %s39
      %s40 = sphi 0, %s37
      %s41 = sphi 0, %s40
      %s57 = sphi 0, %s41
      %s61 = sphi 0, %s61
      %s63 = sphi 0, %s61
      %s64 = sphi 0, %s63
      %s78 = sphi 0, %s64
      %s82 = sphi 0, %s82
      %s84 = sphi 0, %s82
      %s85 = sphi 0, %s84
      %s99 = sphi 0, %s85
      %s107 = sphi 0, %s109
      %s110 = sphi 0, %s107
      %s111 = sphi 0, %s110
      %s127 = sphi 0, %s111
    $region4: #{tpu_custom_call.1} parent=1 // loop_header_branch
      %16 = sbr.rel (%p14) target = $region8
    $region5: #{tpu_custom_call.1} parent=1 // loop_body
      %s18 = ssub.s32 %s13, 1
      %s19 = ssub.s32 %s13, 2
      %s26 = sadd.s32 1, %s21
      %p27 = scmp.ge.s32.totalorder %s26, 1
      %s28 = scalar_select %p27, 0, %s26
      %s29 = sadd.s32 1, %s20
      %s30 = scalar_select %p27, %s29, %s20
      %p31 = scmp.ge.s32.totalorder %s30, 2
      %s32 = scalar_select %p31, 0, %s30
      %s33 = ssub.s32 %s20, %s32
      %s34 = ssub.s32 %s21, %s28
      %s35 = sor.u32 %s33, %s34
      %p36 = scmp.eq.s32.totalorder %s35, 0
      %s38 = sadd.s32 %s37, 1
      %s39 = scalar_select %p36, %s37, %s38
      %p42 = pneg %p36
      %p43 = scmp.eq.s32.totalorder %s13, 1
      %p44 = por %p42, %p43
      %p45 = scmp.ne.s32.totalorder %s37, %s40
      %p46 = scmp.eq.s32.totalorder %s13, 0
      %p47 = por %p45, %p46
      %p48 = scmp.ne.s32.totalorder %s37, %s40
      %p49 = scmp.eq.s32.totalorder %s18, 1
      %p50 = por %p48, %p49
      %p51 = scmp.ne.s32.totalorder %s40, %s41
      %p52 = scmp.eq.s32.totalorder %s18, 0
      %p53 = por %p51, %p52
      %p54 = scmp.ne.s32.totalorder %s40, %s41
      %p55 = scmp.eq.s32.totalorder %s19, 1
      %p56 = por %p54, %p55
      %p58 = scmp.ne.s32.totalorder %s41, %s57
      %p59 = scmp.eq.s32.totalorder %s19, 0
      %p60 = por %p58, %p59
      %s62 = sadd.s32 %s61, 1
      %p65 = scmp.eq.s32.totalorder %s13, 1
      %p66 = scmp.ne.s32.totalorder %s61, %s63
      %p67 = scmp.eq.s32.totalorder %s13, 0
      %p68 = por %p66, %p67
      %p69 = scmp.ne.s32.totalorder %s61, %s63
      %p70 = scmp.eq.s32.totalorder %s18, 1
      %p71 = por %p69, %p70
      %p72 = scmp.ne.s32.totalorder %s63, %s64
      %p73 = scmp.eq.s32.totalorder %s18, 0
      %p74 = por %p72, %p73
      %p75 = scmp.ne.s32.totalorder %s63, %s64
      %p76 = scmp.eq.s32.totalorder %s19, 1
      %p77 = por %p75, %p76
      %p79 = scmp.ne.s32.totalorder %s64, %s78
      %p80 = scmp.eq.s32.totalorder %s19, 0
      %p81 = por %p79, %p80
      %s83 = sadd.s32 %s82, 1
      %p86 = scmp.eq.s32.totalorder %s13, 1
      %p87 = scmp.ne.s32.totalorder %s82, %s84
      %p88 = scmp.eq.s32.totalorder %s13, 0
      %p89 = por %p87, %p88
      %p90 = scmp.ne.s32.totalorder %s82, %s84
      %p91 = scmp.eq.s32.totalorder %s18, 1
      %p92 = por %p90, %p91
      %p93 = scmp.ne.s32.totalorder %s84, %s85
      %p94 = scmp.eq.s32.totalorder %s18, 0
      %p95 = por %p93, %p94
      %p96 = scmp.ne.s32.totalorder %s84, %s85
      %p97 = scmp.eq.s32.totalorder %s19, 1
      %p98 = por %p96, %p97
      %p100 = scmp.ne.s32.totalorder %s85, %s99
      %p101 = scmp.eq.s32.totalorder %s19, 0
      %p102 = por %p100, %p101
      %s103 = ssub.s32 %s20, %s32
      %s104 = ssub.s32 %s21, %s28
      %s105 = sor.u32 %s103, %s104
      %p106 = scmp.eq.s32.totalorder %s105, 0
      %s108 = sadd.s32 %s107, 1
      %s109 = scalar_select %p106, %s107, %s108
      %p112 = pneg %p106
      %p113 = scmp.eq.s32.totalorder %s13, 1
      %p114 = por %p112, %p113
      %p115 = scmp.ne.s32.totalorder %s107, %s110
      %p116 = scmp.eq.s32.totalorder %s13, 0
      %p117 = por %p115, %p116
      %p118 = scmp.ne.s32.totalorder %s107, %s110
      %p119 = scmp.eq.s32.totalorder %s18, 1
      %p120 = por %p118, %p119
      %p121 = scmp.ne.s32.totalorder %s110, %s111
      %p122 = scmp.eq.s32.totalorder %s18, 0
      %p123 = por %p121, %p122
      %p124 = scmp.ne.s32.totalorder %s110, %s111
      %p125 = scmp.eq.s32.totalorder %s19, 1
      %p126 = por %p124, %p125
      %p128 = scmp.ne.s32.totalorder %s111, %s127
      %p129 = scmp.eq.s32.totalorder %s19, 0
      %p130 = por %p128, %p129
      %p131 = scmp.le.s32.totalorder 1, %s13
      %p132 = scmp.lt.s32.totalorder %s13, 3
      %p133 = pnand %p131, %p132
      %p134 = pneg %p133
      // Predicated region
      $region9: #{tpu_custom_call.1} parent=5 // pred_check
        _
      $region10: #{tpu_custom_call.1} parent=5 // pred_check_branch
        %136 = sbr.rel (%p133) target = $region12
      $region11: #{tpu_custom_call.1} parent=5 // pred_region
        %s137 = ssub.s32 %s13, 1
        // Predicated region
        $region13: #{tpu_custom_call.1} parent=11 // pred_check
          %p138 = pneg %p74
        $region14: #{tpu_custom_call.1} parent=11 // pred_check_branch
          %140 = sbr.rel (%p138) target = $region16
        $region15: #{tpu_custom_call.1} parent=11 // pred_region
          %s142 = ssub.s32 256, 256
          %143 = vsyncadd [#allocation5], %s142
          %s144 = sshll.u32 [#allocation4], 4
          %s145 = int_to_ptr.vmem [resolvable:$true] %s144
          %150 = dma.hbm_to_vmem [thread:$0]  %s1, 256, %s145, [#allocation5], 128, 128, 8
        $region16: #{tpu_custom_call.1} parent=11 // pred_fallthru
          _
        // Predicated region
        $region17: #{tpu_custom_call.1} parent=11 // pred_check
          %p151 = pneg %p95
        $region18: #{tpu_custom_call.1} parent=11 // pred_check_branch
          %153 = sbr.rel (%p151) target = $region20
        $region19: #{tpu_custom_call.1} parent=11 // pred_region
          _
        $region20: #{tpu_custom_call.1} parent=11 // pred_fallthru
          _
      $region12: #{tpu_custom_call.1} parent=5 // pred_fallthru
        _
      %p154 = scmp.lt.s32.totalorder %s13, 2
      // Predicated region
      $region21: #{tpu_custom_call.1} parent=5 // pred_check
        %p155 = pneg %p154
      $region22: #{tpu_custom_call.1} parent=5 // pred_check_branch
        %157 = sbr.rel (%p155) target = $region24
      $region23: #{tpu_custom_call.1} parent=5 // pred_region
        // Predicated region
        $region25: #{tpu_custom_call.1} parent=23 // pred_check
          %p158 = pneg %p47
        $region26: #{tpu_custom_call.1} parent=23 // pred_check_branch
          %160 = sbr.rel (%p158) target = $region28
        $region27: #{tpu_custom_call.1} parent=23 // pred_region
          %s161 = sand.u32 %s37, 1
          %s162 = scalar_lea.sflag [#allocation3], %s161
          %s163 = sand.u32 %s37, 1
          %s164 = smul.addr %s163, 64
          %s165 = scalar_lea.vmem [#allocation2], %s164
          %s166 = smul.u32 2, %s21
          %s168 = ssub.s32 1024, 1024
          %169 = vsyncadd %s162, %s168
          %s170 = smul.addr %s20, 8
          %s171 = sadd.s32 %s166, %s170
          %s172 = smul.addr %s171, 128
          %s173 = scalar_lea.hbm %s0, %s172
          %s174 = sshll.u32 %s165, 4
          %s175 = int_to_ptr.vmem [resolvable:$true] %s174
          %180 = dma.hbm_to_vmem [thread:$0]  %s173, 1024, %s175, %s162, 256, 256, 16
        $region28: #{tpu_custom_call.1} parent=23 // pred_fallthru
          _
      $region24: #{tpu_custom_call.1} parent=5 // pred_fallthru
        _
      %p181 = scmp.le.s32.totalorder 1, %s13
      %p182 = scmp.lt.s32.totalorder %s13, 3
      %p183 = pnand %p181, %p182
      %p184 = pneg %p183
      // Predicated region
      $region29: #{tpu_custom_call.1} parent=5 // pred_check
        _
      $region30: #{tpu_custom_call.1} parent=5 // pred_check_branch
        %186 = sbr.rel (%p183) target = $region32
      $region31: #{tpu_custom_call.1} parent=5 // pred_region
        %s187 = ssub.s32 %s13, 1
        %s188 = sand.u32 %s40, 1
        %s189 = scalar_lea.sflag [#allocation3], %s188
        %s190 = sand.u32 %s40, 1
        %s191 = smul.addr %s190, 64
        %s192 = scalar_lea.vmem [#allocation2], %s191
        // Predicated region
        $region33: #{tpu_custom_call.1} parent=31 // pred_check
          %p193 = pneg %p53
        $region34: #{tpu_custom_call.1} parent=31 // pred_check_branch
          %195 = sbr.rel (%p193) target = $region36
        $region35: #{tpu_custom_call.1} parent=31 // pred_region
          %196 = dma.done %s189, 1024
        $region36: #{tpu_custom_call.1} parent=31 // pred_fallthru
          _
        // Predicated region
        $region37: #{tpu_custom_call.1} parent=31 // pred_check
          %p197 = pneg %p74
        $region38: #{tpu_custom_call.1} parent=31 // pred_check_branch
          %199 = sbr.rel (%p197) target = $region40
        $region39: #{tpu_custom_call.1} parent=31 // pred_region
          %200 = dma.done [#allocation5], 256
        $region40: #{tpu_custom_call.1} parent=31 // pred_fallthru
          _
        %s201 = sand.u32 %s40, 1
        %s202 = scalar_lea.sflag [#allocation3], %s201
        %s203 = sand.u32 %s40, 1
        %s204 = smul.addr %s203, 64
        %s205 = scalar_lea.vmem [#allocation2], %s204
        %p206 = pneg %p53
        %p207 = pneg %p50
        %p208 = pneg %p74
        %p209 = pneg %p71
        %p210 = pneg %p95
        %p211 = pneg %p92
        %p212 = pneg %p123
        %p213 = pneg %p120
        %s214 = smul.u32 32, %s23
        %p215 = scmp.lt.s32.totalorder %s22, 1
        %s216 = scalar_select %p215, %s22, 1
        %p217 = scmp.lt.s32.totalorder %s214, 31
        %s218 = scalar_select %p217, %s214, 31
        %s219 = smul.addr %s216, 32
        %s220 = sadd.s32 %s218, %s219
        %s221 = smul.addr %s220, 8
        %s222 = scalar_lea.vmem %s3, %s221
        %s223 = smul.u32 2, %s23
        %s224 = smul.u32 32, %s23
        %p225 = scmp.lt.s32.totalorder %s22, 1
        %s226 = scalar_select %p225, %s22, 1
        %p227 = scmp.lt.s32.totalorder %s224, 31
        %s228 = scalar_select %p227, %s224, 31
        %s229 = smul.addr %s226, 32
        %s230 = sadd.s32 %s228, %s229
        %s231 = smul.addr %s230, 8
        %s232 = scalar_lea.vmem %s3, %s231
        %s233 = smul.u32 32, %s23
        %v234 = vld [vmem:[#allocation4] sm:$0xff]
        %v235 = vld [vmem:[#allocation4 + $0x8] sm:$0xf]
        %v236 = vld [vmem:[%s2] sm:$0x1]
        %v237 = vld [vmem:[%s192] sm:$0xff]
        %v238 = vld [vmem:[%s192 + $0x8] sm:$0xff]
        %v239 = vld [vmem:[%s192 + $0x10] sm:$0xff]
        %v240 = vld [vmem:[%s192 + $0x18] sm:$0xff]
        %v241 = vld [vmem:[%s192 + $0x20] sm:$0xff]
        %v242 = vld [vmem:[%s192 + $0x28] sm:$0xff]
        %v243 = vld [vmem:[%s192 + $0x30] sm:$0xff]
        %v244 = vld [vmem:[%s192 + $0x38] sm:$0xff]
        %vm245 = vcmask 261120
        %v247 = vsel %vm245, %v234, 0
        %v250 = vsel %vm245, %v235, 0
        %252 = vmatprep.subr.mxu0 0.0
        %253 = vmatpush1.msra.mxu0 0.0
        %254 = vmatprep.subr.mxu0 0.0
        %255 = vmatpush1.msra.mxu0 0.0
        %256 = vmatprep.subr.mxu0 0.0
        %257 = vmatpush1.msra.mxu0 0.0
        %258 = vmatprep.subr.mxu0 0.0
        %259 = vmatpush1.msra.mxu0 0.0
        %260 = vmatprep.subr.mxu0 0.0
        %261 = vmatpush1.msra.mxu0 0.0
        %262 = vmatprep.subr.mxu0 0.0
        %263 = vmatpush1.msra.mxu0 0.0
        %264 = vmatprep.subr.mxu0 0.0
        %265 = vmatpush1.msra.mxu0 0.0
        %266 = vmatprep.subr.mxu0 0.0
        %267 = vmatpush1.msra.mxu0 0.0
        %268 = vmatprep.subr.mxu0 0.0
        %269 = vmatpush1.msra.mxu0 0.0
        %270 = vmatprep.subr.mxu0 0.0
        %271 = vmatpush1.msra.mxu0 0.0
        %272 = vmatprep.subr.mxu0 0.0
        %273 = vmatpush1.msra.mxu0 0.0
        %274 = vmatprep.subr.mxu0 0.0
        %275 = vmatpush1.msra.mxu0 0.0
        %276 = vmatprep.subr.mxu0 %v244
        %277 = vmatpush1.msra.mxu0 %v243
        %278 = vmatprep.subr.mxu0 %v242
        %279 = vmatpush1.msra.mxu0 %v241
        %280 = vmatprep.subr.mxu0 %v240
        %281 = vmatpush1.msra.mxu0 %v239
        %282 = vmatprep.subr.mxu0 %v238
        %283 = vmatpush1.msra.mxu0 %v237
        %284 = vmatprep.subr.mxu0 0.0
        %285 = vmatpush2.msra.mxu0 0.0
        %286 = vmatprep.subr.mxu0 0.0
        %287 = vmatpush2.msra.mxu0 0.0
        %288 = vmatprep.subr.mxu0 0.0
        %289 = vmatpush2.msra.mxu0 0.0
        %290 = vmatprep.subr.mxu0 0.0
        %291 = vmatpush2.msra.mxu0 0.0
        %292 = vmatprep.subr.mxu0 0.0
        %293 = vmatpush2.msra.mxu0 0.0
        %294 = vmatprep.subr.mxu0 0.0
        %295 = vmatpush2.msra.mxu0 0.0
        %296 = vmatprep.subr.mxu0 0.0
        %297 = vmatpush2.msra.mxu0 0.0
        %298 = vmatprep.subr.mxu0 0.0
        %299 = vmatpush2.msra.mxu0 0.0
        %300 = vmatprep.subr.mxu0 0.0
        %301 = vmatpush2.msra.mxu0 0.0
        %302 = vmatprep.subr.mxu0 0.0
        %303 = vmatpush2.msra.mxu0 0.0
        %304 = vmatprep.subr.mxu0 0.0
        %305 = vmatpush2.msra.mxu0 0.0
        %306 = vmatprep.subr.mxu0 0.0
        %307 = vmatpush2.msra.mxu0 0.0
        %308 = vmatprep.subr.mxu0 0.0
        %309 = vmatpush2.msra.mxu0 0.0
        %310 = vmatprep.subr.mxu0 0.0
        %311 = vmatpush2.msra.mxu0 0.0
        %312 = vmatprep.subr.mxu0 0.0
        %313 = vmatpush2.msra.mxu0 0.0
        %314 = vmatprep.subr.mxu0 0.0
        %315 = vmatpush2.msra.mxu0 0.0
        %316 = vmatprep.mubr.f32.mxu0 0.0
        %317 = vmatmul.mubr.f32.gmra.mxu0 %v247
        %v318 = vpop.f32.mrf.mxu0
        %v319 = vadd.f32 0.0, %v318
        %v320 = vpop.f32.mrf.mxu0
        %v321 = vadd.f32 0.0, %v320
        %322 = vmatprep.mubr.f32.mxu0 0.0
        %323 = vmatmul.mubr.f32.gmra.mxu0 %v250
        %v324 = vpop.f32.mrf.mxu0
        %v325 = vadd.f32 0.0, %v324
        %v326 = vpop.f32.mrf.mxu0
        %v327 = vadd.f32 0.0, %v326
        %328 = vdwg.mxu0
        %329 = vxpose.xlu0.b32.start [1/16] %v319, 128
        %330 = vxpose.xlu0.b32.cont [2/16] %v325, 128
        %331 = vxpose.xlu0.b32.cont [3/16] 0.0, 128
        %332 = vxpose.xlu0.b32.cont [4/16] 0.0, 128
        %333 = vxpose.xlu0.b32.cont [5/16] 0.0, 128
        %334 = vxpose.xlu0.b32.cont [6/16] 0.0, 128
        %335 = vxpose.xlu0.b32.cont [7/16] 0.0, 128
        %336 = vxpose.xlu0.b32.cont [8/16] 0.0, 128
        %337 = vxpose.xlu0.b32.cont [9/16] 0.0, 128
        %338 = vxpose.xlu0.b32.cont [10/16] 0.0, 128
        %339 = vxpose.xlu0.b32.cont [11/16] 0.0, 128
        %340 = vxpose.xlu0.b32.cont [12/16] 0.0, 128
        %341 = vxpose.xlu0.b32.cont [13/16] 0.0, 128
        %342 = vxpose.xlu0.b32.cont [14/16] 0.0, 128
        %343 = vxpose.xlu0.b32.cont [15/16] 0.0, 128
        %344 = vxpose.xlu0.b32.end [16/16] 0.0, 128
        %v345 = vpop.trf.xlu0
        %v346 = vpop.trf.xlu0
        %v347 = vpop.trf.xlu0
        %v348 = vpop.trf.xlu0
        %v349 = vpop.trf.xlu0
        %v350 = vpop.trf.xlu0
        %v351 = vpop.trf.xlu0
        %v352 = vpop.trf.xlu0
        %v353 = vpop.trf.xlu0
        %v354 = vpop.trf.xlu0
        %v355 = vpop.trf.xlu0
        %v356 = vpop.trf.xlu0
        %v357 = vpop.trf.xlu0
        %v358 = vpop.trf.xlu0
        %v359 = vpop.trf.xlu0
        %v360 = vpop.trf.xlu0
        %361 = vxpose.xlu0.b32.start [1/16] %v321, 128
        %362 = vxpose.xlu0.b32.cont [2/16] %v327, 128
        %363 = vxpose.xlu0.b32.cont [3/16] 0.0, 128
        %364 = vxpose.xlu0.b32.cont [4/16] 0.0, 128
        %365 = vxpose.xlu0.b32.cont [5/16] 0.0, 128
        %366 = vxpose.xlu0.b32.cont [6/16] 0.0, 128
        %367 = vxpose.xlu0.b32.cont [7/16] 0.0, 128
        %368 = vxpose.xlu0.b32.cont [8/16] 0.0, 128
        %369 = vxpose.xlu0.b32.cont [9/16] 0.0, 128
        %370 = vxpose.xlu0.b32.cont [10/16] 0.0, 128
        %371 = vxpose.xlu0.b32.cont [11/16] 0.0, 128
        %372 = vxpose.xlu0.b32.cont [12/16] 0.0, 128
        %373 = vxpose.xlu0.b32.cont [13/16] 0.0, 128
        %374 = vxpose.xlu0.b32.cont [14/16] 0.0, 128
        %375 = vxpose.xlu0.b32.cont [15/16] 0.0, 128
        %376 = vxpose.xlu0.b32.end [16/16] 0.0, 128
        %v377 = vpop.trf.xlu0
        %v378 = vpop.trf.xlu0
        %v379 = vpop.trf.xlu0
        %v380 = vpop.trf.xlu0
        %v381 = vpop.trf.xlu0
        %v382 = vpop.trf.xlu0
        %v383 = vpop.trf.xlu0
        %v384 = vpop.trf.xlu0
        %v385 = vpop.trf.xlu0
        %v386 = vpop.trf.xlu0
        %v387 = vpop.trf.xlu0
        %v388 = vpop.trf.xlu0
        %v389 = vpop.trf.xlu0
        %v390 = vpop.trf.xlu0
        %v391 = vpop.trf.xlu0
        %v392 = vpop.trf.xlu0
        %v394 = vlaneseq
        %v395 = vshrl.u32 %v394, 7
        %v396 = vsub.s32 0, %v395
        %v397 = vrot.slane %v236, %v396
        %v399 = vadd.f32 %v345, %v397
        %v400 = vadd.f32 %v346, %v397
        %v401 = vadd.f32 %v347, %v397
        %v402 = vadd.f32 %v348, %v397
        %v403 = vadd.f32 %v349, %v397
        %v404 = vadd.f32 %v350, %v397
        %v405 = vadd.f32 %v351, %v397
        %v406 = vadd.f32 %v352, %v397
        %v407 = vadd.f32 %v353, %v397
        %v408 = vadd.f32 %v354, %v397
        %v409 = vadd.f32 %v355, %v397
        %v410 = vadd.f32 %v356, %v397
        %v411 = vadd.f32 %v357, %v397
        %v412 = vadd.f32 %v358, %v397
        %v413 = vadd.f32 %v359, %v397
        %v414 = vadd.f32 %v360, %v397
        %v415 = vadd.f32 %v377, %v397
        %v416 = vadd.f32 %v378, %v397
        %v417 = vadd.f32 %v379, %v397
        %v418 = vadd.f32 %v380, %v397
        %v419 = vadd.f32 %v381, %v397
        %v420 = vadd.f32 %v382, %v397
        %v421 = vadd.f32 %v383, %v397
        %v422 = vadd.f32 %v384, %v397
        %v423 = vadd.f32 %v385, %v397
        %v424 = vadd.f32 %v386, %v397
        %v425 = vadd.f32 %v387, %v397
        %v426 = vadd.f32 %v388, %v397
        %v427 = vadd.f32 %v389, %v397
        %v428 = vadd.f32 %v390, %v397
        %v429 = vadd.f32 %v391, %v397
        %v430 = vadd.f32 %v392, %v397
        %vm431 = vcmask 97280
        %432 = vst.msk [vmem:[%s232] sm:$0xff] %vm431, %v399
        %433 = vst.msk [vmem:[%s232 + $0x8] sm:$0xff] %vm431, %v400
        %434 = vst.msk [vmem:[%s232 + $0x10] sm:$0xff] %vm431, %v401
        %435 = vst.msk [vmem:[%s232 + $0x18] sm:$0xff] %vm431, %v402
        %436 = vst.msk [vmem:[%s232 + $0x20] sm:$0xff] %vm431, %v403
        %437 = vst.msk [vmem:[%s232 + $0x28] sm:$0xff] %vm431, %v404
        %438 = vst.msk [vmem:[%s232 + $0x30] sm:$0xff] %vm431, %v405
        %439 = vst.msk [vmem:[%s232 + $0x38] sm:$0xff] %vm431, %v406
        %440 = vst.msk [vmem:[%s232 + $0x40] sm:$0xff] %vm431, %v407
        %441 = vst.msk [vmem:[%s232 + $0x48] sm:$0xff] %vm431, %v408
        %442 = vst.msk [vmem:[%s232 + $0x50] sm:$0xff] %vm431, %v409
        %443 = vst.msk [vmem:[%s232 + $0x58] sm:$0xff] %vm431, %v410
        %444 = vst.msk [vmem:[%s232 + $0x60] sm:$0xff] %vm431, %v411
        %445 = vst.msk [vmem:[%s232 + $0x68] sm:$0xff] %vm431, %v412
        %446 = vst.msk [vmem:[%s232 + $0x70] sm:$0xff] %vm431, %v413
        %447 = vst.msk [vmem:[%s232 + $0x78] sm:$0xff] %vm431, %v414
        %448 = vst.msk [vmem:[%s232 + $0x80] sm:$0xff] %vm431, %v415
        %449 = vst.msk [vmem:[%s232 + $0x88] sm:$0xff] %vm431, %v416
        %450 = vst.msk [vmem:[%s232 + $0x90] sm:$0xff] %vm431, %v417
        %451 = vst.msk [vmem:[%s232 + $0x98] sm:$0xff] %vm431, %v418
        %452 = vst.msk [vmem:[%s232 + $0xa0] sm:$0xff] %vm431, %v419
        %453 = vst.msk [vmem:[%s232 + $0xa8] sm:$0xff] %vm431, %v420
        %454 = vst.msk [vmem:[%s232 + $0xb0] sm:$0xff] %vm431, %v421
        %455 = vst.msk [vmem:[%s232 + $0xb8] sm:$0xff] %vm431, %v422
        %456 = vst.msk [vmem:[%s232 + $0xc0] sm:$0xff] %vm431, %v423
        %457 = vst.msk [vmem:[%s232 + $0xc8] sm:$0xff] %vm431, %v424
        %458 = vst.msk [vmem:[%s232 + $0xd0] sm:$0xff] %vm431, %v425
        %459 = vst.msk [vmem:[%s232 + $0xd8] sm:$0xff] %vm431, %v426
        %460 = vst.msk [vmem:[%s232 + $0xe0] sm:$0xff] %vm431, %v427
        %461 = vst.msk [vmem:[%s232 + $0xe8] sm:$0xff] %vm431, %v428
        %462 = vst.msk [vmem:[%s232 + $0xf0] sm:$0xff] %vm431, %v429
        %463 = vst.msk [vmem:[%s232 + $0xf8] sm:$0xff] %vm431, %v430
        %s464 = smul.u32 32, %s23
        %p465 = scmp.lt.s32.totalorder %s22, 1
        %s466 = scalar_select %p465, %s22, 1
        %p467 = scmp.lt.s32.totalorder %s464, 31
        %s468 = scalar_select %p467, %s464, 31
        %s469 = smul.addr %s466, 32
        %s470 = sadd.s32 %s468, %s469
        %s471 = smul.addr %s470, 8
        %s472 = scalar_lea.vmem %s3, %s471
        // Predicated region
        $region41: #{tpu_custom_call.1} parent=31 // pred_check
          %p473 = pneg %p120
        $region42: #{tpu_custom_call.1} parent=31 // pred_check_branch
          %475 = sbr.rel (%p473) target = $region44
        $region43: #{tpu_custom_call.1} parent=31 // pred_region
          %s476 = smul.u32 32, %s23
        $region44: #{tpu_custom_call.1} parent=31 // pred_fallthru
          _
      $region32: #{tpu_custom_call.1} parent=5 // pred_fallthru
        _
      %p477 = scmp.le.s32.totalorder 2, %s13
      // Predicated region
      $region45: #{tpu_custom_call.1} parent=5 // pred_check
        %p478 = pneg %p477
      $region46: #{tpu_custom_call.1} parent=5 // pred_check_branch
        %480 = sbr.rel (%p478) target = $region48
      $region47: #{tpu_custom_call.1} parent=5 // pred_region
        %s481 = ssub.s32 %s13, 2
        // Predicated region
        $region49: #{tpu_custom_call.1} parent=47 // pred_check
          %p482 = pneg %p126
        $region50: #{tpu_custom_call.1} parent=47 // pred_check_branch
          %484 = sbr.rel (%p482) target = $region52
        $region51: #{tpu_custom_call.1} parent=47 // pred_region
          %s485 = smul.u32 32, %s25
          %p486 = scmp.lt.s32.totalorder %s24, 1
          %s487 = scalar_select %p486, %s24, 1
          %p488 = scmp.lt.s32.totalorder %s485, 31
          %s489 = scalar_select %p488, %s485, 31
          %s490 = smul.addr %s487, 32
          %s491 = sadd.s32 %s489, %s490
          %s492 = smul.addr %s491, 8
          %s493 = scalar_lea.vmem %s3, %s492
        $region52: #{tpu_custom_call.1} parent=47 // pred_fallthru
          _
      $region48: #{tpu_custom_call.1} parent=5 // pred_fallthru
        _
    $region6: #{tpu_custom_call.1} parent=1 // loop_footer
      %s17 = sadd.s32 1, %s13
    $region7: #{tpu_custom_call.1} parent=1 // loop_footer_branch
      %12 = sbr.rel target = $region3
    $region8: #{tpu_custom_call.1} parent=1 // loop_exit
      _
    %494 = vsyncpa [#allocation3], 1
    %s495 = scalar_lea.sflag [#allocation3], 1
    %496 = vsyncpa %s495, 1
    %497 = vsyncpa [#allocation5], 1

</llo_original>
